<compile_context>
chip_gen: v7x
topology: tpu7x:2x2x1
jax: 0.10.0
libtpu: 0.0.40
codegen_flags: <defaults>
</compile_context>

<pallas_src>
import functools

import jax
import jax.numpy as jnp
from jax.experimental import pallas as pl
from jax.experimental.pallas import tpu as pltpu

H1 = 512
H2 = 128
BATCH_TILE = 1024   # max rows per grid step
_ONE_STEP_MAX = 512  # up to this many (padded) rows, run as a single grid step


def _mlp_kernel(x_ref, w1_ref, b1_ref, w2_ref, b2_ref, w3_ref, b3_ref, o_ref):
    # Three MXU matmuls (bf16 operands, f32 accumulation) with fused bias-add
    # and ReLU on the VPU in f32. Logits are stored as bf16 (lane-dense 128-wide
    # output block -> unmasked vst).
    x = x_ref[...].astype(jnp.bfloat16)
    h1 = jnp.dot(x, w1_ref[...], preferred_element_type=jnp.float32) + b1_ref[...]
    h1 = jnp.maximum(h1, 0.0)
    h2 = jnp.dot(h1.astype(jnp.bfloat16), w2_ref[...],
                 preferred_element_type=jnp.float32) + b2_ref[...]
    h2 = jnp.maximum(h2, 0.0)
    logits = jnp.dot(h2.astype(jnp.bfloat16), w3_ref[...],
                     preferred_element_type=jnp.float32) + b3_ref[...]
    o_ref[...] = logits.astype(o_ref.dtype)


def _round_up(x, m):
    return ((x + m - 1) // m) * m


def _pad_to(x, shape):
    pads = [(0, t - s) for s, t in zip(x.shape, shape)]
    return jnp.pad(x, pads)


def init_pgn_params(key, input_size, n_actions):
    """Raw f32 params matching PGN's three Linear layers.

    Weights are (in_features, out_features) — i.e. PyTorch weight.T.
    """
    keys = jax.random.split(key, 6)

    def lin(kw, kb, fan_in, fan_out):
        bound = 1.0 / jnp.sqrt(jnp.float32(fan_in))  # PyTorch default init bound
        w = jax.random.uniform(kw, (fan_in, fan_out), jnp.float32, -bound, bound)
        b = jax.random.uniform(kb, (fan_out,), jnp.float32, -bound, bound)
        return w, b

    w1, b1 = lin(keys[0], keys[1], input_size, H1)
    w2, b2 = lin(keys[2], keys[3], H1, H2)
    w3, b3 = lin(keys[4], keys[5], H2, n_actions)
    return (w1, b1, w2, b2, w3, b3)


def prepare_pgn_params(params, input_size, n_actions):
    """One-time padding + dtype conversion of raw params (do NOT call per step)."""
    del input_size  # no feature-dim padding needed anymore
    w1, b1, w2, b2, w3, b3 = params
    A_p = max(128, _round_up(n_actions, 128))          # lane-dense output width
    w1_p = w1.astype(jnp.bfloat16)                      # (input_size, 512)
    b1_p = b1.reshape(1, H1).astype(jnp.float32)
    w2_p = w2.astype(jnp.bfloat16)                      # (512, 128)
    b2_p = b2.reshape(1, H2).astype(jnp.float32)
    w3_p = _pad_to(w3.astype(jnp.bfloat16), (H2, A_p))  # (128, 128)
    b3_p = _pad_to(b3.reshape(1, -1).astype(jnp.float32), (1, A_p))
    return (w1_p, b1_p, w2_p, b2_p, w3_p, b3_p)


@functools.partial(jax.jit, static_argnames=("n_actions",))
def pgn_forward(x, padded_params, *, n_actions):
    """Forward pass. x: (B, input_size) f32 -> (B, n_actions) f32 logits."""
    w1_p, b1_p, w2_p, b2_p, w3_p, b3_p = padded_params
    B, F = x.shape
    A_p = w3_p.shape[1]

    # Batch tiling (bf16 output -> multiples of 16):
    #  * small/medium batches: one grid step (per-step overhead dominates).
    #  * large rollout batches: >= 2 tiles of at most BATCH_TILE rows so both
    #    v7x TensorCores get work; tiles rounded to 256 rows.
    B_p = _round_up(max(B, 16), 16)
    if B_p <= _ONE_STEP_MAX:
        bm = B_p
    else:
        bm = min(BATCH_TILE, _round_up(pl.cdiv(B_p, 2), 256))
        B_p = _round_up(B_p, bm)
    n_tiles = B_p // bm

    x_p = x if B_p == B else jnp.pad(x, ((0, B_p - B), (0, 0)))

    out_p = pl.pallas_call(
        _mlp_kernel,
        out_shape=jax.ShapeDtypeStruct((B_p, A_p), jnp.bfloat16),
        grid=(n_tiles,),
        in_specs=[
            pl.BlockSpec((bm, F), lambda i: (i, 0)),     # x tile (full feature dim)
            pl.BlockSpec((F, H1), lambda i: (0, 0)),     # w1 (resident)
            pl.BlockSpec((1, H1), lambda i: (0, 0)),     # b1
            pl.BlockSpec((H1, H2), lambda i: (0, 0)),    # w2
            pl.BlockSpec((1, H2), lambda i: (0, 0)),     # b2
            pl.BlockSpec((H2, A_p), lambda i: (0, 0)),   # w3
            pl.BlockSpec((1, A_p), lambda i: (0, 0)),    # b3
        ],
        out_specs=pl.BlockSpec((bm, A_p), lambda i: (i, 0)),
        # NOTE: on v7x, pltpu.CORE_PARALLEL on this axis is what actually splits
        # the grid across the two TensorCores; plain "parallel" is kept here for
        # portability across generations.
        compiler_params=pltpu.CompilerParams(
            dimension_semantics=("parallel",)),
    )(x_p, w1_p, b1_p, w2_p, b2_p, w3_p, b3_p)

    # Narrow slice first, then cast back to f32 (keeps the HBM read narrow).
    return out_p[:B, :n_actions].astype(jnp.float32)


def pgn_forward_ref(x, params, *, quantize_bf16=False):
    """Pure-JAX reference. quantize_bf16=True mimics the kernel's bf16 rounding
    of x/w1/w2/w3, the inter-layer activations, and the bf16 logit store."""
    w1, b1, w2, b2, w3, b3 = params
    q = (lambda a: a.astype(jnp.bfloat16).astype(jnp.float32)) if quantize_bf16 \
        else (lambda a: a)
    hp = jax.lax.Precision.HIGHEST
    h1 = jnp.maximum(jnp.dot(q(x), q(w1), precision=hp) + b1, 0.0)
    h2 = jnp.maximum(jnp.dot(q(h1), q(w2), precision=hp) + b2, 0.0)
    out = jnp.dot(q(h2), q(w3), precision=hp) + b3
    return q(out)


if __name__ == "__main__":
    input_size = 4   # CartPole observation dim
    n_actions = 2    # CartPole action dim

    key = jax.random.PRNGKey(0)
    k_x, k_x2, k_p = jax.random.split(key, 3)

    raw_params = init_pgn_params(k_p, input_size, n_actions)
    params = prepare_pgn_params(raw_params, input_size, n_actions)  # once, at init

    # --- small batch (single grid step) ---
    batch = 8
    x = jax.random.normal(k_x, (batch, input_size), jnp.float32)
    out = jax.block_until_ready(pgn_forward(x, params, n_actions=n_actions))
    assert out.shape == (batch, n_actions)

    ref_q = pgn_forward_ref(x, raw_params, quantize_bf16=True)
    assert jnp.allclose(out, ref_q, atol=1e-2, rtol=1e-2), "mismatch vs quantized ref"
    ref = pgn_forward_ref(x, raw_params, quantize_bf16=False)
    assert jnp.allclose(out, ref, atol=5e-2, rtol=5e-2), "mismatch vs f32 ref"

    # --- larger rollout batch (exercises the multi-tile path) ---
    batch2 = 600
    x2 = jax.random.normal(k_x2, (batch2, input_size), jnp.float32)
    out2 = jax.block_until_ready(pgn_forward(x2, params, n_actions=n_actions))
    assert out2.shape == (batch2, n_actions)

    ref2_q = pgn_forward_ref(x2, raw_params, quantize_bf16=True)
    assert jnp.allclose(out2, ref2_q, atol=1e-2, rtol=1e-2), "mismatch vs quantized ref (tiled)"
    ref2 = pgn_forward_ref(x2, raw_params, quantize_bf16=False)
    assert jnp.allclose(out2, ref2, atol=5e-2, rtol=5e-2), "mismatch vs f32 ref (tiled)"

    print("KERNEL_OK")
</pallas_src>

<mosaic_0001>
module attributes {stable_mosaic.version = 11 : i64} {
  func.func @_mlp_kernel(%arg0: i32, %arg1: memref<16x4xf32, #tpu.memory_space<vmem>>, %arg2: memref<4x512xbf16, #tpu.memory_space<vmem>>, %arg3: memref<1x512xf32, #tpu.memory_space<vmem>>, %arg4: memref<512x128xbf16, #tpu.memory_space<vmem>>, %arg5: memref<1x128xf32, #tpu.memory_space<vmem>>, %arg6: memref<128x128xbf16, #tpu.memory_space<vmem>>, %arg7: memref<1x128xf32, #tpu.memory_space<vmem>>, %arg8: memref<16x128xbf16, #tpu.memory_space<vmem>>) attributes {dimension_semantics = [#tpu.dimension_semantics<parallel>], iteration_bounds = array<i64: 1>, scalar_prefetch = 0 : i64, scratch_operands = 0 : i64, tpu.core_type = #tpu.core_type<tc>, window_params = [{transform_indices = @transform_0, window_bounds = array<i64: 16, 4>}, {pipeline_mode = #tpu.pipeline_mode<synchronous>, transform_indices = @transform_1, window_bounds = array<i64: 4, 512>}, {pipeline_mode = #tpu.pipeline_mode<synchronous>, transform_indices = @transform_2, window_bounds = array<i64: 1, 512>}, {pipeline_mode = #tpu.pipeline_mode<synchronous>, transform_indices = @transform_3, window_bounds = array<i64: 512, 128>}, {pipeline_mode = #tpu.pipeline_mode<synchronous>, transform_indices = @transform_4, window_bounds = array<i64: 1, 128>}, {pipeline_mode = #tpu.pipeline_mode<synchronous>, transform_indices = @transform_5, window_bounds = array<i64: 128, 128>}, {pipeline_mode = #tpu.pipeline_mode<synchronous>, transform_indices = @transform_6, window_bounds = array<i64: 1, 128>}, {transform_indices = @transform_7, window_bounds = array<i64: 16, 128>}]} {
    %c0 = arith.constant 0 : index
    %c0_0 = arith.constant 0 : index
    %0 = vector.load %arg1[%c0, %c0_0] : memref<16x4xf32, #tpu.memory_space<vmem>>, vector<16x4xf32>
    %1 = arith.truncf %0 : vector<16x4xf32> to vector<16x4xbf16>
    %c0_1 = arith.constant 0 : index
    %c0_2 = arith.constant 0 : index
    %2 = vector.load %arg2[%c0_1, %c0_2] : memref<4x512xbf16, #tpu.memory_space<vmem>>, vector<4x512xbf16>
    %cst = arith.constant dense<0.000000e+00> : vector<16x512xf32>
    %3 = tpu.matmul %1, %2, %cst {dimension_numbers = #tpu.dot_dimension_numbers<[1], [0], [0], [1], [0, 0, 1, 1], [], []>} : vector<16x4xbf16>, vector<4x512xbf16>, vector<16x512xf32> -> vector<16x512xf32>
    %c0_3 = arith.constant 0 : index
    %c0_4 = arith.constant 0 : index
    %4 = vector.load %arg3[%c0_3, %c0_4] : memref<1x512xf32, #tpu.memory_space<vmem>>, vector<1x512xf32>
    %5 = vector.broadcast %4 : vector<1x512xf32> to vector<16x512xf32>
    %6 = arith.addf %3, %5 : vector<16x512xf32>
    %cst_5 = arith.constant 0.000000e+00 : f32
    %7 = vector.broadcast %cst_5 : f32 to vector<16x512xf32>
    %8 = arith.maximumf %6, %7 : vector<16x512xf32>
    %9 = arith.truncf %8 : vector<16x512xf32> to vector<16x512xbf16>
    %c0_6 = arith.constant 0 : index
    %c0_7 = arith.constant 0 : index
    %10 = vector.load %arg4[%c0_6, %c0_7] : memref<512x128xbf16, #tpu.memory_space<vmem>>, vector<512x128xbf16>
    %cst_8 = arith.constant dense<0.000000e+00> : vector<16x128xf32>
    %11 = tpu.matmul %9, %10, %cst_8 {dimension_numbers = #tpu.dot_dimension_numbers<[1], [0], [0], [1], [0, 0, 1, 1], [], []>} : vector<16x512xbf16>, vector<512x128xbf16>, vector<16x128xf32> -> vector<16x128xf32>
    %c0_9 = arith.constant 0 : index
    %c0_10 = arith.constant 0 : index
    %12 = vector.load %arg5[%c0_9, %c0_10] : memref<1x128xf32, #tpu.memory_space<vmem>>, vector<1x128xf32>
    %13 = vector.broadcast %12 : vector<1x128xf32> to vector<16x128xf32>
    %14 = arith.addf %11, %13 : vector<16x128xf32>
    %cst_11 = arith.constant 0.000000e+00 : f32
    %15 = vector.broadcast %cst_11 : f32 to vector<16x128xf32>
    %16 = arith.maximumf %14, %15 : vector<16x128xf32>
    %17 = arith.truncf %16 : vector<16x128xf32> to vector<16x128xbf16>
    %c0_12 = arith.constant 0 : index
    %c0_13 = arith.constant 0 : index
    %18 = vector.load %arg6[%c0_12, %c0_13] : memref<128x128xbf16, #tpu.memory_space<vmem>>, vector<128x128xbf16>
    %cst_14 = arith.constant dense<0.000000e+00> : vector<16x128xf32>
    %19 = tpu.matmul %17, %18, %cst_14 {dimension_numbers = #tpu.dot_dimension_numbers<[1], [0], [0], [1], [0, 0, 1, 1], [], []>} : vector<16x128xbf16>, vector<128x128xbf16>, vector<16x128xf32> -> vector<16x128xf32>
    %c0_15 = arith.constant 0 : index
    %c0_16 = arith.constant 0 : index
    %20 = vector.load %arg7[%c0_15, %c0_16] : memref<1x128xf32, #tpu.memory_space<vmem>>, vector<1x128xf32>
    %21 = vector.broadcast %20 : vector<1x128xf32> to vector<16x128xf32>
    %22 = arith.addf %19, %21 : vector<16x128xf32>
    %23 = arith.truncf %22 : vector<16x128xf32> to vector<16x128xbf16>
    %c0_17 = arith.constant 0 : index
    %c0_18 = arith.constant 0 : index
    %24 = vector.load %arg8[%c0_17, %c0_18] : memref<16x128xbf16, #tpu.memory_space<vmem>>, vector<16x128xbf16>
    tpu.vector_store %arg8[%c0_17, %c0_18], %23 {strides = array<i32>} : memref<16x128xbf16, #tpu.memory_space<vmem>>, vector<16x128xbf16>,
    return
  }
  func.func @transform_0(%arg0: i32) -> (i32, i32) {
    %c0_i32 = arith.constant 0 : i32
    %c0_i32_0 = arith.constant 0 : i32
    return %arg0, %c0_i32 : i32, i32
  }
  func.func @transform_1(%arg0: i32) -> (i32, i32) {
    %c0_i32 = arith.constant 0 : i32
    %c0_i32_0 = arith.constant 0 : i32
    %c0_i32_1 = arith.constant 0 : i32
    return %c0_i32, %c0_i32_0 : i32, i32
  }
  func.func @transform_2(%arg0: i32) -> (i32, i32) {
    %c0_i32 = arith.constant 0 : i32
    %c0_i32_0 = arith.constant 0 : i32
    %c0_i32_1 = arith.constant 0 : i32
    return %c0_i32, %c0_i32_0 : i32, i32
  }
  func.func @transform_3(%arg0: i32) -> (i32, i32) {
    %c0_i32 = arith.constant 0 : i32
    %c0_i32_0 = arith.constant 0 : i32
    %c0_i32_1 = arith.constant 0 : i32
    return %c0_i32, %c0_i32_0 : i32, i32
  }
  func.func @transform_4(%arg0: i32) -> (i32, i32) {
    %c0_i32 = arith.constant 0 : i32
    %c0_i32_0 = arith.constant 0 : i32
    %c0_i32_1 = arith.constant 0 : i32
    return %c0_i32, %c0_i32_0 : i32, i32
  }
  func.func @transform_5(%arg0: i32) -> (i32, i32) {
    %c0_i32 = arith.constant 0 : i32
    %c0_i32_0 = arith.constant 0 : i32
    %c0_i32_1 = arith.constant 0 : i32
    return %c0_i32, %c0_i32_0 : i32, i32
  }
  func.func @transform_6(%arg0: i32) -> (i32, i32) {
    %c0_i32 = arith.constant 0 : i32
    %c0_i32_0 = arith.constant 0 : i32
    %c0_i32_1 = arith.constant 0 : i32
    return %c0_i32, %c0_i32_0 : i32, i32
  }
  func.func @transform_7(%arg0: i32) -> (i32, i32) {
    %c0_i32 = arith.constant 0 : i32
    %c0_i32_0 = arith.constant 0 : i32
    return %arg0, %c0_i32 : i32, i32
  }
}

</mosaic_0001>

<llo_original>
// kernel: pgn_forward.1
$region0: #{pgn_forward.1}
  #allocation0 [shape = 'u32[]', space=smem, size = 0x4, offset = 0x4, fixed_abs, tag = 'smem constant byte address 0x4 - core index']
  #allocation1 [shape = 'u32[144,128]{1,0:T(1,128)}', space=vmem, size = 0x12000, scoped, tag = 'internal scratch']
  %s0 = inlined_call_operand.vmem [shape: f32[16,4], index: 0, kind: input, shape index: {}]
  %s1 = inlined_call_operand.vmem [shape: bf16[4,512], index: 1, kind: input, shape index: {}]
  %s2 = inlined_call_operand.vmem [shape: f32[1,512], index: 2, kind: input, shape index: {}]
  %s3 = inlined_call_operand.hbm [shape: bf16[512,128], index: 3, kind: input, shape index: {}]
  %s4 = inlined_call_operand.vmem [shape: f32[1,128], index: 4, kind: input, shape index: {}]
  %s5 = inlined_call_operand.hbm [shape: bf16[128,128], index: 5, kind: input, shape index: {}]
  %s6 = inlined_call_operand.vmem [shape: f32[1,128], index: 6, kind: input, shape index: {}]
  %s7 = inlined_call_operand.vmem [shape: bf16[16,128], index: 7, kind: output, shape index: {}]
  %s8 = sld [smem:[#allocation0]]
  $region46: #{pgn_forward.1} parent=0
    _
  %s10 = ssub.s32 1, %s8
  %s11 = scalar_select 0, %s10, %s8
  $region1: #{pgn_forward.1} parent=0
    #allocation2 [shape = 'u8[131072]{0}', space=vmem, size = 0x20000, scoped, tag = 'input window, operand 3, single buffered']
    #allocation3 [shape = 's32[1]{0}', space=sflag, size = 0x4, scoped, tag = 'scoped memory for pgn_forward.1']
    #allocation4 [shape = 'u8[32768]{0}', space=vmem, size = 0x8000, scoped, tag = 'input window, operand 5, single buffered']
    #allocation5 [shape = 's32[1]{0}', space=sflag, size = 0x4, scoped, tag = 'scoped memory for pgn_forward.1']
    %12 = vsyncpa [#allocation3], 0
    %13 = vsyncpa [#allocation5], 0
    // Predicated region
    $region2: #{pgn_forward.1} parent=1 // pred_check
      _
    $region3: #{pgn_forward.1} parent=1 // pred_check_branch
      %15 = sbr.rel (0) target = $region5
    $region4: #{pgn_forward.1} parent=1 // pred_region
      _
    $region5: #{pgn_forward.1} parent=1 // pred_fallthru
      _
    // Predicated region
    $region6: #{pgn_forward.1} parent=1 // pred_check
      _
    $region7: #{pgn_forward.1} parent=1 // pred_check_branch
      %17 = sbr.rel (0) target = $region9
    $region8: #{pgn_forward.1} parent=1 // pred_region
      _
    $region9: #{pgn_forward.1} parent=1 // pred_fallthru
      _
    // Predicated region
    $region10: #{pgn_forward.1} parent=1 // pred_check
      _
    $region11: #{pgn_forward.1} parent=1 // pred_check_branch
      %19 = sbr.rel (0) target = $region13
    $region12: #{pgn_forward.1} parent=1 // pred_region
      _
    $region13: #{pgn_forward.1} parent=1 // pred_fallthru
      _
    // Predicated region
    $region14: #{pgn_forward.1} parent=1 // pred_check
      _
    $region15: #{pgn_forward.1} parent=1 // pred_check_branch
      %21 = sbr.rel (0) target = $region17
    $region16: #{pgn_forward.1} parent=1 // pred_region
      %s23 = ssub.s32 4096, 4096
      %24 = vsyncadd [#allocation3], %s23
      %s25 = sshll.u32 [#allocation2], 4
      %s26 = int_to_ptr.vmem [resolvable:$true] %s25
      %31 = dma.hbm_to_vmem [thread:$0]  %s3, 4096, %s26, [#allocation3], 64, 64, 4
    $region17: #{pgn_forward.1} parent=1 // pred_fallthru
      _
    // Predicated region
    $region18: #{pgn_forward.1} parent=1 // pred_check
      _
    $region19: #{pgn_forward.1} parent=1 // pred_check_branch
      %33 = sbr.rel (0) target = $region21
    $region20: #{pgn_forward.1} parent=1 // pred_region
      _
    $region21: #{pgn_forward.1} parent=1 // pred_fallthru
      _
    // Predicated region
    $region22: #{pgn_forward.1} parent=1 // pred_check
      _
    $region23: #{pgn_forward.1} parent=1 // pred_check_branch
      %35 = sbr.rel (0) target = $region25
    $region24: #{pgn_forward.1} parent=1 // pred_region
      %s37 = ssub.s32 1024, 1024
      %38 = vsyncadd [#allocation5], %s37
      %s39 = sshll.u32 [#allocation4], 4
      %s40 = int_to_ptr.vmem [resolvable:$true] %s39
      %45 = dma.hbm_to_vmem [thread:$0]  %s5, 1024, %s40, [#allocation5], 64, 64, 4
    $region25: #{pgn_forward.1} parent=1 // pred_fallthru
      _
    // Predicated region
    $region26: #{pgn_forward.1} parent=1 // pred_check
      _
    $region27: #{pgn_forward.1} parent=1 // pred_check_branch
      %47 = sbr.rel (0) target = $region29
    $region28: #{pgn_forward.1} parent=1 // pred_region
      _
    $region29: #{pgn_forward.1} parent=1 // pred_fallthru
      _
    // Predicated region
    $region30: #{pgn_forward.1} parent=1 // pred_check
      _
    $region31: #{pgn_forward.1} parent=1 // pred_check_branch
      %49 = sbr.rel (0) target = $region33
    $region32: #{pgn_forward.1} parent=1 // pred_region
      %50 = dma.done [#allocation3], 4096
    $region33: #{pgn_forward.1} parent=1 // pred_fallthru
      _
    // Predicated region
    $region34: #{pgn_forward.1} parent=1 // pred_check
      _
    $region35: #{pgn_forward.1} parent=1 // pred_check_branch
      %52 = sbr.rel (0) target = $region37
    $region36: #{pgn_forward.1} parent=1 // pred_region
      %53 = dma.done [#allocation5], 1024
    $region37: #{pgn_forward.1} parent=1 // pred_fallthru
      _
    %v55 = vld [vmem:[%s0] sm:$0xff]
    %v56 = vld [vmem:[%s0 + $0x8] sm:$0xff]
    %v57 = vpack.c.bf16 %v56, %v55
    %v58 = vld [vmem:[%s1] sm:$0xff]
    %v59 = vld [vmem:[%s2] sm:$0xf]
    %v61 = vlaneseq
    %v62 = vshrl.u32 %v61, 7
    %v63 = vsub.s32 0, %v62
    %v64 = vrot.slane %v59, %v63
    %v65 = vlaneseq
    %v66 = vshrl.u32 %v65, 7
    %v67 = vsub.s32 1, %v66
    %v68 = vrot.slane %v59, %v67
    %v69 = vlaneseq
    %v70 = vshrl.u32 %v69, 7
    %v71 = vsub.s32 2, %v70
    %v72 = vrot.slane %v59, %v71
    %v73 = vlaneseq
    %v74 = vshrl.u32 %v73, 7
    %v75 = vsub.s32 3, %v74
    %v76 = vrot.slane %v59, %v75
    %v82 = vcombine.high %v58, %v58
    %v84 = vunpack.c.l.s4 1983009808
    %v85 = vunpack.c.0.s8 %v84
    %v86 = vlaneseq
    %v87 = vshrl.u32 %v86, 7
    %v88 = vsub.s32 %v85, %v87
    %v89 = vrot.slane %v58, %v88
    %v91 = vunpack.c.l.s4 1983009808
    %v92 = vunpack.c.0.s8 %v91
    %v93 = vlaneseq
    %v94 = vshrl.u32 %v93, 7
    %v95 = vsub.s32 %v92, %v94
    %v96 = vrot.slane %v82, %v95
    %v97 = vcombine.high %v89, %v89
    %v98 = vcombine.high %v96, %v96
    %vm99 = vcmask 31744
    %v101 = vsel %vm99, %v57, 0
    %vm103 = vcmask 1041408
    %v105 = vsel %vm103, %v89, 0
    %v108 = vsel %vm103, %v97, 0
    %v111 = vsel %vm103, %v96, 0
    %v114 = vsel %vm103, %v98, 0
    %116 = vmatprep.subr.bf16.mxu0 %v108
    %117 = vmatpush1.bf16.msra.mxu0 %v105
    %118 = vmatprep.subr.bf16.mxu0 0
    %119 = vmatpush1.bf16.msra.mxu0 0
    %120 = vmatprep.subr.bf16.mxu0 0
    %121 = vmatpush1.bf16.msra.mxu0 0
    %122 = vmatprep.subr.bf16.mxu0 0
    %123 = vmatpush1.bf16.msra.mxu0 0
    %124 = vmatprep.subr.bf16.mxu0 0
    %125 = vmatpush1.bf16.msra.mxu0 0
    %126 = vmatprep.subr.bf16.mxu0 0
    %127 = vmatpush1.bf16.msra.mxu0 0
    %128 = vmatprep.subr.bf16.mxu0 0
    %129 = vmatpush1.bf16.msra.mxu0 0
    %130 = vmatprep.subr.bf16.mxu0 0
    %131 = vmatpush1.bf16.msra.mxu0 0
    %132 = vmatprep.subr.bf16.mxu0 0
    %133 = vmatpush1.bf16.msra.mxu0 0
    %134 = vmatprep.subr.bf16.mxu0 0
    %135 = vmatpush1.bf16.msra.mxu0 0
    %136 = vmatprep.subr.bf16.mxu0 0
    %137 = vmatpush1.bf16.msra.mxu0 0
    %138 = vmatprep.subr.bf16.mxu0 0
    %139 = vmatpush1.bf16.msra.mxu0 0
    %140 = vmatprep.subr.bf16.mxu0 0
    %141 = vmatpush1.bf16.msra.mxu0 0
    %142 = vmatprep.subr.bf16.mxu0 0
    %143 = vmatpush1.bf16.msra.mxu0 0
    %144 = vmatprep.subr.bf16.mxu0 0
    %145 = vmatpush1.bf16.msra.mxu0 0
    %146 = vmatprep.subr.bf16.mxu0 0
    %147 = vmatpush1.bf16.msra.mxu0 0
    %148 = vmatprep.mubr.bf16.mxu0 0
    %149 = vmatmul.mubr.bf16.gmra.mrb[0].mxu0 %v101
    %v150 = vpop.f32.mrb[0].mxu0
    %v151 = vadd.f32 %v64, %v150
    %v152 = vpop.f32.mrb[0].mxu0
    %v153 = vadd.f32 %v68, %v152
    %v154 = vpop.f32.mrb[0].mxu0
    %v155 = vadd.f32 %v64, %v154
    %v156 = vpop.f32.mrb[0].mxu0
    %v157 = vadd.f32 %v68, %v156
    %158 = vdwg.mxu0
    %159 = vmatprep.subr.bf16.mxu0 %v114
    %160 = vmatpush1.bf16.msra.mxu0 %v111
    %161 = vmatprep.subr.bf16.mxu0 0
    %162 = vmatpush1.bf16.msra.mxu0 0
    %163 = vmatprep.subr.bf16.mxu0 0
    %164 = vmatpush1.bf16.msra.mxu0 0
    %165 = vmatprep.subr.bf16.mxu0 0
    %166 = vmatpush1.bf16.msra.mxu0 0
    %167 = vmatprep.subr.bf16.mxu0 0
    %168 = vmatpush1.bf16.msra.mxu0 0
    %169 = vmatprep.subr.bf16.mxu0 0
    %170 = vmatpush1.bf16.msra.mxu0 0
    %171 = vmatprep.subr.bf16.mxu0 0
    %172 = vmatpush1.bf16.msra.mxu0 0
    %173 = vmatprep.subr.bf16.mxu0 0
    %174 = vmatpush1.bf16.msra.mxu0 0
    %175 = vmatprep.subr.bf16.mxu0 0
    %176 = vmatpush1.bf16.msra.mxu0 0
    %177 = vmatprep.subr.bf16.mxu0 0
    %178 = vmatpush1.bf16.msra.mxu0 0
    %179 = vmatprep.subr.bf16.mxu0 0
    %180 = vmatpush1.bf16.msra.mxu0 0
    %181 = vmatprep.subr.bf16.mxu0 0
    %182 = vmatpush1.bf16.msra.mxu0 0
    %183 = vmatprep.subr.bf16.mxu0 0
    %184 = vmatpush1.bf16.msra.mxu0 0
    %185 = vmatprep.subr.bf16.mxu0 0
    %186 = vmatpush1.bf16.msra.mxu0 0
    %187 = vmatprep.subr.bf16.mxu0 0
    %188 = vmatpush1.bf16.msra.mxu0 0
    %189 = vmatprep.subr.bf16.mxu0 0
    %190 = vmatpush1.bf16.msra.mxu0 0
    %191 = vmatprep.mubr.bf16.mxu0 0
    %192 = vmatmul.mubr.bf16.gmra.mrb[0].mxu0 %v101
    %v193 = vpop.f32.mrb[0].mxu0
    %v194 = vadd.f32 %v72, %v193
    %v195 = vpop.f32.mrb[0].mxu0
    %v196 = vadd.f32 %v76, %v195
    %v197 = vpop.f32.mrb[0].mxu0
    %v198 = vadd.f32 %v72, %v197
    %v199 = vpop.f32.mrb[0].mxu0
    %v200 = vadd.f32 %v76, %v199
    %201 = vdwg.mxu0
    %v202 = vmax.f32 %v151, 0.0
    %v203 = vmax.f32 %v153, 0.0
    %v204 = vmax.f32 %v194, 0.0
    %v205 = vmax.f32 %v196, 0.0
    %v206 = vmax.f32 %v155, 0.0
    %v207 = vmax.f32 %v157, 0.0
    %v208 = vmax.f32 %v198, 0.0
    %v209 = vmax.f32 %v200, 0.0
    %v210 = vpack.c.bf16 %v206, %v202
    %v211 = vpack.c.bf16 %v207, %v203
    %v212 = vpack.c.bf16 %v208, %v204
    %v213 = vpack.c.bf16 %v209, %v205
    %v214 = vld [vmem:[#allocation2] sm:$0xf]
    %v215 = vld [vmem:[#allocation2 + $0x4] sm:$0xf]
    %v216 = vld [vmem:[#allocation2 + $0x8] sm:$0xf]
    %v217 = vld [vmem:[#allocation2 + $0xc] sm:$0xf]
    %v218 = vld [vmem:[#allocation2 + $0x10] sm:$0xf]
    %v219 = vld [vmem:[#allocation2 + $0x14] sm:$0xf]
    %v220 = vld [vmem:[#allocation2 + $0x18] sm:$0xf]
    %v221 = vld [vmem:[#allocation2 + $0x1c] sm:$0xf]
    %v222 = vld [vmem:[#allocation2 + $0x20] sm:$0xf]
    %v223 = vld [vmem:[#allocation2 + $0x24] sm:$0xf]
    %v224 = vld [vmem:[#allocation2 + $0x28] sm:$0xf]
    %v225 = vld [vmem:[#allocation2 + $0x2c] sm:$0xf]
    %v226 = vld [vmem:[#allocation2 + $0x30] sm:$0xf]
    %v227 = vld [vmem:[#allocation2 + $0x34] sm:$0xf]
    %v228 = vld [vmem:[#allocation2 + $0x38] sm:$0xf]
    %v229 = vld [vmem:[#allocation2 + $0x3c] sm:$0xf]
    %v230 = vld [vmem:[#allocation2 + $0x40] sm:$0xf]
    %v231 = vld [vmem:[#allocation2 + $0x44] sm:$0xf]
    %v232 = vld [vmem:[#allocation2 + $0x48] sm:$0xf]
    %v233 = vld [vmem:[#allocation2 + $0x4c] sm:$0xf]
    %v234 = vld [vmem:[#allocation2 + $0x50] sm:$0xf]
    %v235 = vld [vmem:[#allocation2 + $0x54] sm:$0xf]
    %v236 = vld [vmem:[#allocation2 + $0x58] sm:$0xf]
    %v237 = vld [vmem:[#allocation2 + $0x5c] sm:$0xf]
    %v238 = vld [vmem:[#allocation2 + $0x60] sm:$0xf]
    %v239 = vld [vmem:[#allocation2 + $0x64] sm:$0xf]
    %v240 = vld [vmem:[#allocation2 + $0x68] sm:$0xf]
    %v241 = vld [vmem:[#allocation2 + $0x6c] sm:$0xf]
    %v242 = vld [vmem:[#allocation2 + $0x70] sm:$0xf]
    %v243 = vld [vmem:[#allocation2 + $0x74] sm:$0xf]
    %v244 = vld [vmem:[#allocation2 + $0x78] sm:$0xf]
    %v245 = vld [vmem:[#allocation2 + $0x7c] sm:$0xf]
    %v246 = vld [vmem:[#allocation2 + $0x80] sm:$0xf]
    %v247 = vld [vmem:[#allocation2 + $0x84] sm:$0xf]
    %v248 = vld [vmem:[#allocation2 + $0x88] sm:$0xf]
    %v249 = vld [vmem:[#allocation2 + $0x8c] sm:$0xf]
    %v250 = vld [vmem:[#allocation2 + $0x90] sm:$0xf]
    %v251 = vld [vmem:[#allocation2 + $0x94] sm:$0xf]
    %v252 = vld [vmem:[#allocation2 + $0x98] sm:$0xf]
    %v253 = vld [vmem:[#allocation2 + $0x9c] sm:$0xf]
    %v254 = vld [vmem:[#allocation2 + $0xa0] sm:$0xf]
    %v255 = vld [vmem:[#allocation2 + $0xa4] sm:$0xf]
    %v256 = vld [vmem:[#allocation2 + $0xa8] sm:$0xf]
    %v257 = vld [vmem:[#allocation2 + $0xac] sm:$0xf]
    %v258 = vld [vmem:[#allocation2 + $0xb0] sm:$0xf]
    %v259 = vld [vmem:[#allocation2 + $0xb4] sm:$0xf]
    %v260 = vld [vmem:[#allocation2 + $0xb8] sm:$0xf]
    %v261 = vld [vmem:[#allocation2 + $0xbc] sm:$0xf]
    %v262 = vld [vmem:[#allocation2 + $0xc0] sm:$0xf]
    %v263 = vld [vmem:[#allocation2 + $0xc4] sm:$0xf]
    %v264 = vld [vmem:[#allocation2 + $0xc8] sm:$0xf]
    %v265 = vld [vmem:[#allocation2 + $0xcc] sm:$0xf]
    %v266 = vld [vmem:[#allocation2 + $0xd0] sm:$0xf]
    %v267 = vld [vmem:[#allocation2 + $0xd4] sm:$0xf]
    %v268 = vld [vmem:[#allocation2 + $0xd8] sm:$0xf]
    %v269 = vld [vmem:[#allocation2 + $0xdc] sm:$0xf]
    %v270 = vld [vmem:[#allocation2 + $0xe0] sm:$0xf]
    %v271 = vld [vmem:[#allocation2 + $0xe4] sm:$0xf]
    %v272 = vld [vmem:[#allocation2 + $0xe8] sm:$0xf]
    %v273 = vld [vmem:[#allocation2 + $0xec] sm:$0xf]
    %v274 = vld [vmem:[#allocation2 + $0xf0] sm:$0xf]
    %v275 = vld [vmem:[#allocation2 + $0xf4] sm:$0xf]
    %v276 = vld [vmem:[#allocation2 + $0xf8] sm:$0xf]
    %v277 = vld [vmem:[#allocation2 + $0xfc] sm:$0xf]
    %v278 = vld [vmem:[%s4] sm:$0x1]
    %v280 = vlaneseq
    %v281 = vshrl.u32 %v280, 7
    %v282 = vsub.s32 0, %v281
    %v283 = vrot.slane %v278, %v282
    %v349 = vunpack.c.l.b16 %v214
    %v350 = vunpack.c.l.b16 %v215
    %v351 = vunpack.c.l.b16 %v216
    %v352 = vunpack.c.l.b16 %v217
    %v353 = vunpack.c.l.b16 %v218
    %v354 = vunpack.c.l.b16 %v219
    %v355 = vunpack.c.l.b16 %v220
    %v356 = vunpack.c.l.b16 %v221
    %v357 = vunpack.c.l.b16 %v222
    %v358 = vunpack.c.l.b16 %v223
    %v359 = vunpack.c.l.b16 %v224
    %v360 = vunpack.c.l.b16 %v225
    %v361 = vunpack.c.l.b16 %v226
    %v362 = vunpack.c.l.b16 %v227
    %v363 = vunpack.c.l.b16 %v228
    %v364 = vunpack.c.l.b16 %v229
    %v365 = vunpack.c.l.b16 %v230
    %v366 = vunpack.c.l.b16 %v231
    %v367 = vunpack.c.l.b16 %v232
    %v368 = vunpack.c.l.b16 %v233
    %v369 = vunpack.c.l.b16 %v234
    %v370 = vunpack.c.l.b16 %v235
    %v371 = vunpack.c.l.b16 %v236
    %v372 = vunpack.c.l.b16 %v237
    %v373 = vunpack.c.l.b16 %v238
    %v374 = vunpack.c.l.b16 %v239
    %v375 = vunpack.c.l.b16 %v240
    %v376 = vunpack.c.l.b16 %v241
    %v377 = vunpack.c.l.b16 %v242
    %v378 = vunpack.c.l.b16 %v243
    %v379 = vunpack.c.l.b16 %v244
    %v380 = vunpack.c.l.b16 %v245
    %v381 = vunpack.c.l.b16 %v246
    %v382 = vunpack.c.l.b16 %v247
    %v383 = vunpack.c.l.b16 %v248
    %v384 = vunpack.c.l.b16 %v249
    %v385 = vunpack.c.l.b16 %v250
    %v386 = vunpack.c.l.b16 %v251
    %v387 = vunpack.c.l.b16 %v252
    %v388 = vunpack.c.l.b16 %v253
    %v389 = vunpack.c.l.b16 %v254
    %v390 = vunpack.c.l.b16 %v255
    %v391 = vunpack.c.l.b16 %v256
    %v392 = vunpack.c.l.b16 %v257
    %v393 = vunpack.c.l.b16 %v258
    %v394 = vunpack.c.l.b16 %v259
    %v395 = vunpack.c.l.b16 %v260
    %v396 = vunpack.c.l.b16 %v261
    %v397 = vunpack.c.l.b16 %v262
    %v398 = vunpack.c.l.b16 %v263
    %v399 = vunpack.c.l.b16 %v264
    %v400 = vunpack.c.l.b16 %v265
    %v401 = vunpack.c.l.b16 %v266
    %v402 = vunpack.c.l.b16 %v267
    %v403 = vunpack.c.l.b16 %v268
    %v404 = vunpack.c.l.b16 %v269
    %v405 = vunpack.c.l.b16 %v270
    %v406 = vunpack.c.l.b16 %v271
    %v407 = vunpack.c.l.b16 %v272
    %v408 = vunpack.c.l.b16 %v273
    %v409 = vunpack.c.l.b16 %v274
    %v410 = vunpack.c.l.b16 %v275
    %v411 = vunpack.c.l.b16 %v276
    %v412 = vunpack.c.l.b16 %v277
    %v413 = vpack.c.b16 %v350, %v349
    %v414 = vpack.c.b16 %v352, %v351
    %v415 = vpack.c.b16 %v354, %v353
    %v416 = vpack.c.b16 %v356, %v355
    %v417 = vpack.c.b16 %v358, %v357
    %v418 = vpack.c.b16 %v360, %v359
    %v419 = vpack.c.b16 %v362, %v361
    %v420 = vpack.c.b16 %v364, %v363
    %v421 = vpack.c.b16 %v366, %v365
    %v422 = vpack.c.b16 %v368, %v367
    %v423 = vpack.c.b16 %v370, %v369
    %v424 = vpack.c.b16 %v372, %v371
    %v425 = vpack.c.b16 %v374, %v373
    %v426 = vpack.c.b16 %v376, %v375
    %v427 = vpack.c.b16 %v378, %v377
    %v428 = vpack.c.b16 %v380, %v379
    %v429 = vpack.c.b16 %v382, %v381
    %v430 = vpack.c.b16 %v384, %v383
    %v431 = vpack.c.b16 %v386, %v385
    %v432 = vpack.c.b16 %v388, %v387
    %v433 = vpack.c.b16 %v390, %v389
    %v434 = vpack.c.b16 %v392, %v391
    %v435 = vpack.c.b16 %v394, %v393
    %v436 = vpack.c.b16 %v396, %v395
    %v437 = vpack.c.b16 %v398, %v397
    %v438 = vpack.c.b16 %v400, %v399
    %v439 = vpack.c.b16 %v402, %v401
    %v440 = vpack.c.b16 %v404, %v403
    %v441 = vpack.c.b16 %v406, %v405
    %v442 = vpack.c.b16 %v408, %v407
    %v443 = vpack.c.b16 %v410, %v409
    %v444 = vpack.c.b16 %v412, %v411
    %477 = vmatprep.subr.bf16.mxu0 0
    %478 = vmatpush1.bf16.msra.mxu0 %v413
    %479 = vmatprep.subr.bf16.mxu0 0
    %480 = vmatpush1.bf16.msra.mxu0 %v414
    %481 = vmatprep.subr.bf16.mxu0 0
    %482 = vmatpush1.bf16.msra.mxu0 %v415
    %483 = vmatprep.subr.bf16.mxu0 0
    %484 = vmatpush1.bf16.msra.mxu0 %v416
    %485 = vmatprep.subr.bf16.mxu0 0
    %486 = vmatpush1.bf16.msra.mxu0 %v417
    %487 = vmatprep.subr.bf16.mxu0 0
    %488 = vmatpush1.bf16.msra.mxu0 %v418
    %489 = vmatprep.subr.bf16.mxu0 0
    %490 = vmatpush1.bf16.msra.mxu0 %v419
    %491 = vmatprep.subr.bf16.mxu0 0
    %492 = vmatpush1.bf16.msra.mxu0 %v420
    %493 = vmatprep.subr.bf16.mxu0 0
    %494 = vmatpush1.bf16.msra.mxu0 %v421
    %495 = vmatprep.subr.bf16.mxu0 0
    %496 = vmatpush1.bf16.msra.mxu0 %v422
    %497 = vmatprep.subr.bf16.mxu0 0
    %498 = vmatpush1.bf16.msra.mxu0 %v423
    %499 = vmatprep.subr.bf16.mxu0 0
    %500 = vmatpush1.bf16.msra.mxu0 %v424
    %501 = vmatprep.subr.bf16.mxu0 0
    %502 = vmatpush1.bf16.msra.mxu0 %v425
    %503 = vmatprep.subr.bf16.mxu0 0
    %504 = vmatpush1.bf16.msra.mxu0 %v426
    %505 = vmatprep.subr.bf16.mxu0 0
    %506 = vmatpush1.bf16.msra.mxu0 %v427
    %507 = vmatprep.subr.bf16.mxu0 0
    %508 = vmatpush1.bf16.msra.mxu0 %v428
    %509 = vmatprep.mubr.bf16.mxu0 %v211
    %510 = vmatmul.mubr.bf16.gmra.mrb[0].mxu0 %v210
    %v511 = vpop.f32.mrb[0].mxu0
    %v512 = vadd.f32 %v283, %v511
    %v513 = vpop.f32.mrb[0].mxu0
    %v514 = vpop.f32.mrb[0].mxu0
    %v515 = vadd.f32 %v283, %v514
    %v516 = vpop.f32.mrb[0].mxu0
    %517 = vdwg.mxu0
    %518 = vmatprep.subr.bf16.mxu0 0
    %519 = vmatpush1.bf16.msra.mxu0 %v429
    %520 = vmatprep.subr.bf16.mxu0 0
    %521 = vmatpush1.bf16.msra.mxu0 %v430
    %522 = vmatprep.subr.bf16.mxu0 0
    %523 = vmatpush1.bf16.msra.mxu0 %v431
    %524 = vmatprep.subr.bf16.mxu0 0
    %525 = vmatpush1.bf16.msra.mxu0 %v432
    %526 = vmatprep.subr.bf16.mxu0 0
    %527 = vmatpush1.bf16.msra.mxu0 %v433
    %528 = vmatprep.subr.bf16.mxu0 0
    %529 = vmatpush1.bf16.msra.mxu0 %v434
    %530 = vmatprep.subr.bf16.mxu0 0
    %531 = vmatpush1.bf16.msra.mxu0 %v435
    %532 = vmatprep.subr.bf16.mxu0 0
    %533 = vmatpush1.bf16.msra.mxu0 %v436
    %534 = vmatprep.subr.bf16.mxu0 0
    %535 = vmatpush1.bf16.msra.mxu0 %v437
    %536 = vmatprep.subr.bf16.mxu0 0
    %537 = vmatpush1.bf16.msra.mxu0 %v438
    %538 = vmatprep.subr.bf16.mxu0 0
    %539 = vmatpush1.bf16.msra.mxu0 %v439
    %540 = vmatprep.subr.bf16.mxu0 0
    %541 = vmatpush1.bf16.msra.mxu0 %v440
    %542 = vmatprep.subr.bf16.mxu0 0
    %543 = vmatpush1.bf16.msra.mxu0 %v441
    %544 = vmatprep.subr.bf16.mxu0 0
    %545 = vmatpush1.bf16.msra.mxu0 %v442
    %546 = vmatprep.subr.bf16.mxu0 0
    %547 = vmatpush1.bf16.msra.mxu0 %v443
    %548 = vmatprep.subr.bf16.mxu0 0
    %549 = vmatpush1.bf16.msra.mxu0 %v444
    %550 = vmatprep.mubr.bf16.mxu0 %v213
    %551 = vmatmul.mubr.bf16.gmra.mrb[0].mxu0 %v212
    %v552 = vpop.f32.mrb[0].mxu0
    %v553 = vadd.f32 %v512, %v552
    %v554 = vpop.f32.mrb[0].mxu0
    %v555 = vpop.f32.mrb[0].mxu0
    %v556 = vadd.f32 %v515, %v555
    %v557 = vpop.f32.mrb[0].mxu0
    %558 = vdwg.mxu0
    %v559 = vmax.f32 %v553, 0.0
    %v560 = vmax.f32 %v556, 0.0
    %v561 = vpack.c.bf16 %v560, %v559
    %v562 = vld [vmem:[#allocation4] sm:$0xf]
    %v563 = vld [vmem:[#allocation4 + $0x4] sm:$0xf]
    %v564 = vld [vmem:[#allocation4 + $0x8] sm:$0xf]
    %v565 = vld [vmem:[#allocation4 + $0xc] sm:$0xf]
    %v566 = vld [vmem:[#allocation4 + $0x10] sm:$0xf]
    %v567 = vld [vmem:[#allocation4 + $0x14] sm:$0xf]
    %v568 = vld [vmem:[#allocation4 + $0x18] sm:$0xf]
    %v569 = vld [vmem:[#allocation4 + $0x1c] sm:$0xf]
    %v570 = vld [vmem:[#allocation4 + $0x20] sm:$0xf]
    %v571 = vld [vmem:[#allocation4 + $0x24] sm:$0xf]
    %v572 = vld [vmem:[#allocation4 + $0x28] sm:$0xf]
    %v573 = vld [vmem:[#allocation4 + $0x2c] sm:$0xf]
    %v574 = vld [vmem:[#allocation4 + $0x30] sm:$0xf]
    %v575 = vld [vmem:[#allocation4 + $0x34] sm:$0xf]
    %v576 = vld [vmem:[#allocation4 + $0x38] sm:$0xf]
    %v577 = vld [vmem:[#allocation4 + $0x3c] sm:$0xf]
    %v578 = vld [vmem:[%s6] sm:$0x1]
    %v580 = vlaneseq
    %v581 = vshrl.u32 %v580, 7
    %v582 = vsub.s32 0, %v581
    %v583 = vrot.slane %v578, %v582
    %v601 = vunpack.c.l.b16 %v562
    %v602 = vunpack.c.l.b16 %v563
    %v603 = vunpack.c.l.b16 %v564
    %v604 = vunpack.c.l.b16 %v565
    %v605 = vunpack.c.l.b16 %v566
    %v606 = vunpack.c.l.b16 %v567
    %v607 = vunpack.c.l.b16 %v568
    %v608 = vunpack.c.l.b16 %v569
    %v609 = vunpack.c.l.b16 %v570
    %v610 = vunpack.c.l.b16 %v571
    %v611 = vunpack.c.l.b16 %v572
    %v612 = vunpack.c.l.b16 %v573
    %v613 = vunpack.c.l.b16 %v574
    %v614 = vunpack.c.l.b16 %v575
    %v615 = vunpack.c.l.b16 %v576
    %v616 = vunpack.c.l.b16 %v577
    %v617 = vpack.c.b16 %v602, %v601
    %v618 = vpack.c.b16 %v604, %v603
    %v619 = vpack.c.b16 %v606, %v605
    %v620 = vpack.c.b16 %v608, %v607
    %v621 = vpack.c.b16 %v610, %v609
    %v622 = vpack.c.b16 %v612, %v611
    %v623 = vpack.c.b16 %v614, %v613
    %v624 = vpack.c.b16 %v616, %v615
    %633 = vmatprep.subr.bf16.mxu0 0
    %634 = vmatpush1.bf16.msra.mxu0 %v617
    %635 = vmatprep.subr.bf16.mxu0 0
    %636 = vmatpush1.bf16.msra.mxu0 %v618
    %637 = vmatprep.subr.bf16.mxu0 0
    %638 = vmatpush1.bf16.msra.mxu0 %v619
    %639 = vmatprep.subr.bf16.mxu0 0
    %640 = vmatpush1.bf16.msra.mxu0 %v620
    %641 = vmatprep.subr.bf16.mxu0 0
    %642 = vmatpush1.bf16.msra.mxu0 %v621
    %643 = vmatprep.subr.bf16.mxu0 0
    %644 = vmatpush1.bf16.msra.mxu0 %v622
    %645 = vmatprep.subr.bf16.mxu0 0
    %646 = vmatpush1.bf16.msra.mxu0 %v623
    %647 = vmatprep.subr.bf16.mxu0 0
    %648 = vmatpush1.bf16.msra.mxu0 %v624
    %649 = vmatprep.subr.bf16.mxu0 0
    %650 = vmatpush1.bf16.msra.mxu0 0
    %651 = vmatprep.subr.bf16.mxu0 0
    %652 = vmatpush1.bf16.msra.mxu0 0
    %653 = vmatprep.subr.bf16.mxu0 0
    %654 = vmatpush1.bf16.msra.mxu0 0
    %655 = vmatprep.subr.bf16.mxu0 0
    %656 = vmatpush1.bf16.msra.mxu0 0
    %657 = vmatprep.subr.bf16.mxu0 0
    %658 = vmatpush1.bf16.msra.mxu0 0
    %659 = vmatprep.subr.bf16.mxu0 0
    %660 = vmatpush1.bf16.msra.mxu0 0
    %661 = vmatprep.subr.bf16.mxu0 0
    %662 = vmatpush1.bf16.msra.mxu0 0
    %663 = vmatprep.subr.bf16.mxu0 0
    %664 = vmatpush1.bf16.msra.mxu0 0
    %665 = vmatprep.mubr.bf16.mxu0 0
    %666 = vmatmul.mubr.bf16.gmra.mrb[0].mxu0 %v561
    %v667 = vpop.f32.mrb[0].mxu0
    %v668 = vadd.f32 %v583, %v667
    %v669 = vpop.f32.mrb[0].mxu0
    %v670 = vpop.f32.mrb[0].mxu0
    %v671 = vadd.f32 %v583, %v670
    %v672 = vpop.f32.mrb[0].mxu0
    %673 = vdwg.mxu0
    %v674 = vpack.c.bf16 %v671, %v668
    %v676 = vunpack.c.l.b16 %v674
    %v677 = vunpack.c.h.b16 %v674
    %v678 = vpack.c.b16 %v676, %v676
    %v679 = vpack.c.b16 %v677, %v677
    %682 = vst [vmem:[%s7] sm:$0xf] %v678
    %683 = vst [vmem:[%s7 + $0x4] sm:$0xf] %v679
    // Predicated region
    $region38: #{pgn_forward.1} parent=1 // pred_check
      _
    $region39: #{pgn_forward.1} parent=1 // pred_check_branch
      %685 = sbr.rel (0) target = $region41
    $region40: #{pgn_forward.1} parent=1 // pred_region
      _
    $region41: #{pgn_forward.1} parent=1 // pred_fallthru
      _
    // Predicated region
    $region42: #{pgn_forward.1} parent=1 // pred_check
      _
    $region43: #{pgn_forward.1} parent=1 // pred_check_branch
      %687 = sbr.rel (0) target = $region45
    $region44: #{pgn_forward.1} parent=1 // pred_region
      _
    $region45: #{pgn_forward.1} parent=1 // pred_fallthru
      _
    %688 = vsyncpa [#allocation3], 1
    %689 = vsyncpa [#allocation5], 1

</llo_original>
